<compile_context>
chip_gen: v7x
topology: tpu7x:2x2x1
jax: 0.10.0
libtpu: 0.0.40
codegen_flags: <defaults>
</compile_context>

<pallas_src>
import functools

import jax
import jax.numpy as jnp
import numpy as np
from jax.experimental import pallas as pl
from jax.experimental.pallas import tpu as pltpu


def _haar_operator_np(W: int) -> np.ndarray:
    """(2W, 2W) operator acting on a packed row [even_row | odd_row].

    Output columns: [0, w2) = LL, [w2, W) = HL, [W, W+w2) = LH, [W+w2, 2W) = HH,
    with the 1/2 scale of dwt_init folded in.
    """
    w2 = W // 2
    M = np.zeros((2 * W, 2 * W), np.float32)
    j = np.arange(w2)
    a = 2 * j          # even row, even col
    c = 2 * j + 1      # even row, odd col
    b = W + 2 * j      # odd row,  even col
    d = W + 2 * j + 1  # odd row,  odd col
    # LL = ( a + b + c + d) / 2
    M[a, j] = 0.5;          M[b, j] = 0.5;          M[c, j] = 0.5;          M[d, j] = 0.5
    # HL = (-a - b + c + d) / 2
    M[a, w2 + j] = -0.5;    M[b, w2 + j] = -0.5;    M[c, w2 + j] = 0.5;     M[d, w2 + j] = 0.5
    # LH = (-a + b - c + d) / 2
    M[a, W + j] = -0.5;     M[b, W + j] = 0.5;      M[c, W + j] = -0.5;     M[d, W + j] = 0.5
    # HH = ( a - b - c + d) / 2
    M[a, W + w2 + j] = 0.5; M[b, W + w2 + j] = -0.5; M[c, W + w2 + j] = -0.5; M[d, W + w2 + j] = 0.5
    return M


def _choose_tiles(C: int, h2: int, two_w: int, itemsize: int,
                  target_bytes: int = 1 << 20):
    """Pick (C_t, H2_t) so the input block is ~target_bytes and BlockSpec-legal."""
    target_rows = max(8, target_bytes // max(1, two_w * itemsize))
    if h2 <= target_rows:
        h2_t = h2                              # full extent -> always legal
        c_t = max(1, min(C, target_rows // h2))
        while C % c_t:                         # keep a divisor of C
            c_t -= 1
    else:
        c_t = 1
        h2_t = h2                              # fallback: full extent
        cand = 8
        while cand <= min(h2, target_rows):    # largest mult-of-8 divisor
            if h2 % cand == 0:
                h2_t = cand
            cand += 8
    return c_t, h2_t


def _dwt_kernel(x_ref, m_ref, o_ref, *, c_t, h2_t, W):
    # x_ref: (C_t, H2_t, 2W)   row-pair-packed input tile (native dtype)
    # m_ref: (2W, 2W)          constant Haar operator (native dtype)
    # o_ref: (4, C_t, H2_t, W/2) output tile, band-major
    w2 = W // 2
    Xm = x_ref[...].reshape(c_t * h2_t, 2 * W)
    # Single MXU matmul, f32 accumulation; no large intermediate besides Y.
    Y = jnp.dot(Xm, m_ref[...], preferred_element_type=jnp.float32)
    Y = Y.reshape(c_t, h2_t, 2 * W).astype(o_ref.dtype)
    # Bands live in contiguous w2-wide column blocks of Y -> four static slab
    # stores.  Lane-aligned (unmasked vst) whenever w2 % 128 == 0.
    for b in range(4):
        o_ref[b] = Y[:, :, b * w2:(b + 1) * w2]


def dwt_forward(x):
    """DWT.forward: (N, C, H, W) -> (N, 4C, H/2, W/2), bands [LL, HL, LH, HH]."""
    N, C, H, W = x.shape
    assert H % 2 == 0 and W % 2 == 0, "DWT requires even spatial dims"
    h2, w2, two_w = H // 2, W // 2, 2 * W
    itemsize = jnp.dtype(x.dtype).itemsize

    c_t, h2_t = _choose_tiles(C, h2, two_w, itemsize)

    # Contiguous (free) reshape: packs each row pair into one 2W-wide row.
    x_packed = x.reshape(N, C, h2, two_w)
    # Operator in the input dtype (+/-0.5 exact in bf16); accumulate in f32.
    m_op = jnp.asarray(_haar_operator_np(W), dtype=x.dtype)

    # VMEM budget (double-buffered in/out blocks + operator + f32 result),
    # kept well under every chip's limit (v7x: 64 MiB physical per TC).
    blk_bytes = c_t * h2_t * two_w * itemsize
    op_bytes = two_w * two_w * itemsize
    acc_bytes = c_t * h2_t * two_w * 4
    need = 2 * (blk_bytes + blk_bytes) + 2 * op_bytes + acc_bytes
    vmem_limit = int(min(max(4 * need, 8 << 20), 32 << 20))

    cost = pl.CostEstimate(
        flops=2 * N * C * h2 * two_w * two_w,       # ~4*N*C*H*W^2
        transcendentals=0,
        bytes_accessed=2 * N * C * H * W * itemsize + op_bytes,
    )

    kernel = functools.partial(_dwt_kernel, c_t=c_t, h2_t=h2_t, W=W)

    out5 = pl.pallas_call(
        kernel,
        out_shape=jax.ShapeDtypeStruct((N, 4, C, h2, w2), x.dtype),
        grid=(N, C // c_t, h2 // h2_t),
        in_specs=[
            pl.BlockSpec((pl.Squeezed(), c_t, h2_t, two_w),
                         lambda n, c, h: (n, c, h, 0)),
            pl.BlockSpec((two_w, two_w), lambda n, c, h: (0, 0)),
        ],
        out_specs=pl.BlockSpec((pl.Squeezed(), 4, c_t, h2_t, w2),
                               lambda n, c, h: (n, 0, c, h, 0)),
        compiler_params=pltpu.CompilerParams(
            dimension_semantics=("parallel", "parallel", "parallel"),
            vmem_limit_bytes=vmem_limit),
        cost_estimate=cost,
    )(x_packed, m_op)

    # (N, 4, C, h2, w2) -> (N, 4C, h2, w2): contiguous view, free; channel
    # index = band*C + c, matching torch.cat((LL, HL, LH, HH), dim=1).
    return out5.reshape(N, 4 * C, h2, w2)


def dwt_ref(x):
    """Pure-JAX mirror of the PyTorch dwt_init, for correctness checking."""
    x01 = x[:, :, 0::2, :] / 2
    x02 = x[:, :, 1::2, :] / 2
    x1 = x01[:, :, :, 0::2]
    x2 = x02[:, :, :, 0::2]
    x3 = x01[:, :, :, 1::2]
    x4 = x02[:, :, :, 1::2]
    x_LL = x1 + x2 + x3 + x4
    x_HL = -x1 - x2 + x3 + x4
    x_LH = -x1 + x2 - x3 + x4
    x_HH = x1 - x2 - x3 + x4
    return jnp.concatenate((x_LL, x_HL, x_LH, x_HH), axis=1)


if __name__ == "__main__":
    N, C, H, W = 2, 4, 16, 16
    x = jax.random.normal(jax.random.PRNGKey(0), (N, C, H, W), jnp.float32)

    out = jax.block_until_ready(dwt_forward(x))
    assert out.shape == (N, 4 * C, H // 2, W // 2), out.shape

    ref = dwt_ref(x)
    np.testing.assert_allclose(np.asarray(out), np.asarray(ref),
                               rtol=1e-5, atol=1e-5)

    print("KERNEL_OK")
</pallas_src>

<mosaic_0001>
module attributes {stable_mosaic.version = 11 : i64} {
  func.func @_dwt_kernel(%arg0: i32, %arg1: i32, %arg2: i32, %arg3: memref<1x4x8x32xf32, #tpu.memory_space<vmem>>, %arg4: memref<32x32xf32, #tpu.memory_space<vmem>>, %arg5: memref<1x4x4x8x8xf32, #tpu.memory_space<vmem>>) attributes {dimension_semantics = [#tpu.dimension_semantics<parallel>, #tpu.dimension_semantics<parallel>, #tpu.dimension_semantics<parallel>], iteration_bounds = array<i64: 2, 1, 1>, scalar_prefetch = 0 : i64, scratch_operands = 0 : i64, tpu.core_type = #tpu.core_type<tc>, window_params = [{transform_indices = @transform_0, window_bounds = array<i64: 1, 4, 8, 32>}, {pipeline_mode = #tpu.pipeline_mode<synchronous>, transform_indices = @transform_1, window_bounds = array<i64: 32, 32>}, {transform_indices = @transform_2, window_bounds = array<i64: 1, 4, 4, 8, 8>}]} {
    %c0 = arith.constant 0 : index
    %c0_0 = arith.constant 0 : index
    %c0_1 = arith.constant 0 : index
    %c0_2 = arith.constant 0 : index
    %0 = vector.load %arg3[%c0, %c0_0, %c0_1, %c0_2] : memref<1x4x8x32xf32, #tpu.memory_space<vmem>>, vector<1x4x8x32xf32>
    %1 = vector.shape_cast %0 : vector<1x4x8x32xf32> to vector<4x8x32xf32>
    %2 = vector.shape_cast %1 : vector<4x8x32xf32> to vector<32x32xf32>
    %c0_3 = arith.constant 0 : index
    %c0_4 = arith.constant 0 : index
    %3 = vector.load %arg4[%c0_3, %c0_4] : memref<32x32xf32, #tpu.memory_space<vmem>>, vector<32x32xf32>
    %cst = arith.constant dense<0.000000e+00> : vector<32x32xf32>
    %4 = tpu.matmul %2, %3, %cst {dimension_numbers = #tpu.dot_dimension_numbers<[1], [0], [0], [1], [0, 0, 1, 1], [], []>} : vector<32x32xf32>, vector<32x32xf32>, vector<32x32xf32> -> vector<32x32xf32>
    %5 = vector.shape_cast %4 : vector<32x32xf32> to vector<4x8x32xf32>
    %6 = vector.extract_strided_slice %5 {offsets = [0, 0, 0], sizes = [4, 8, 8], strides = [1, 1, 1]} : vector<4x8x32xf32> to vector<4x8x8xf32>
    %c0_5 = arith.constant 0 : index
    %c0_6 = arith.constant 0 : index
    %c0_7 = arith.constant 0 : index
    %c0_8 = arith.constant 0 : index
    %c0_9 = arith.constant 0 : index
    %7 = vector.load %arg5[%c0_5, %c0_6, %c0_7, %c0_8, %c0_9] : memref<1x4x4x8x8xf32, #tpu.memory_space<vmem>>, vector<1x1x4x8x8xf32>
    %8 = vector.shape_cast %7 : vector<1x1x4x8x8xf32> to vector<4x8x8xf32>
    %9 = vector.shape_cast %6 : vector<4x8x8xf32> to vector<1x1x4x8x8xf32>
    tpu.vector_store %arg5[%c0_5, %c0_6, %c0_7, %c0_8, %c0_9], %9 {strides = array<i32>} : memref<1x4x4x8x8xf32, #tpu.memory_space<vmem>>, vector<1x1x4x8x8xf32>,
    %10 = vector.extract_strided_slice %5 {offsets = [0, 0, 8], sizes = [4, 8, 8], strides = [1, 1, 1]} : vector<4x8x32xf32> to vector<4x8x8xf32>
    %c0_10 = arith.constant 0 : index
    %c1 = arith.constant 1 : index
    %c0_11 = arith.constant 0 : index
    %c0_12 = arith.constant 0 : index
    %c0_13 = arith.constant 0 : index
    %11 = vector.load %arg5[%c0_10, %c1, %c0_11, %c0_12, %c0_13] : memref<1x4x4x8x8xf32, #tpu.memory_space<vmem>>, vector<1x1x4x8x8xf32>
    %12 = vector.shape_cast %11 : vector<1x1x4x8x8xf32> to vector<4x8x8xf32>
    %13 = vector.shape_cast %10 : vector<4x8x8xf32> to vector<1x1x4x8x8xf32>
    tpu.vector_store %arg5[%c0_10, %c1, %c0_11, %c0_12, %c0_13], %13 {strides = array<i32>} : memref<1x4x4x8x8xf32, #tpu.memory_space<vmem>>, vector<1x1x4x8x8xf32>,
    %14 = vector.extract_strided_slice %5 {offsets = [0, 0, 16], sizes = [4, 8, 8], strides = [1, 1, 1]} : vector<4x8x32xf32> to vector<4x8x8xf32>
    %c0_14 = arith.constant 0 : index
    %c2 = arith.constant 2 : index
    %c0_15 = arith.constant 0 : index
    %c0_16 = arith.constant 0 : index
    %c0_17 = arith.constant 0 : index
    %15 = vector.load %arg5[%c0_14, %c2, %c0_15, %c0_16, %c0_17] : memref<1x4x4x8x8xf32, #tpu.memory_space<vmem>>, vector<1x1x4x8x8xf32>
    %16 = vector.shape_cast %15 : vector<1x1x4x8x8xf32> to vector<4x8x8xf32>
    %17 = vector.shape_cast %14 : vector<4x8x8xf32> to vector<1x1x4x8x8xf32>
    tpu.vector_store %arg5[%c0_14, %c2, %c0_15, %c0_16, %c0_17], %17 {strides = array<i32>} : memref<1x4x4x8x8xf32, #tpu.memory_space<vmem>>, vector<1x1x4x8x8xf32>,
    %18 = vector.extract_strided_slice %5 {offsets = [0, 0, 24], sizes = [4, 8, 8], strides = [1, 1, 1]} : vector<4x8x32xf32> to vector<4x8x8xf32>
    %c0_18 = arith.constant 0 : index
    %c3 = arith.constant 3 : index
    %c0_19 = arith.constant 0 : index
    %c0_20 = arith.constant 0 : index
    %c0_21 = arith.constant 0 : index
    %19 = vector.load %arg5[%c0_18, %c3, %c0_19, %c0_20, %c0_21] : memref<1x4x4x8x8xf32, #tpu.memory_space<vmem>>, vector<1x1x4x8x8xf32>
    %20 = vector.shape_cast %19 : vector<1x1x4x8x8xf32> to vector<4x8x8xf32>
    %21 = vector.shape_cast %18 : vector<4x8x8xf32> to vector<1x1x4x8x8xf32>
    tpu.vector_store %arg5[%c0_18, %c3, %c0_19, %c0_20, %c0_21], %21 {strides = array<i32>} : memref<1x4x4x8x8xf32, #tpu.memory_space<vmem>>, vector<1x1x4x8x8xf32>,
    return
  }
  func.func @transform_0(%arg0: i32, %arg1: i32, %arg2: i32) -> (i32, i32, i32, i32) {
    %c0_i32 = arith.constant 0 : i32
    %c0_i32_0 = arith.constant 0 : i32
    return %arg0, %arg1, %arg2, %c0_i32 : i32, i32, i32, i32
  }
  func.func @transform_1(%arg0: i32, %arg1: i32, %arg2: i32) -> (i32, i32) {
    %c0_i32 = arith.constant 0 : i32
    %c0_i32_0 = arith.constant 0 : i32
    %c0_i32_1 = arith.constant 0 : i32
    return %c0_i32, %c0_i32_0 : i32, i32
  }
  func.func @transform_2(%arg0: i32, %arg1: i32, %arg2: i32) -> (i32, i32, i32, i32, i32) {
    %c0_i32 = arith.constant 0 : i32
    %c0_i32_0 = arith.constant 0 : i32
    %c0_i32_1 = arith.constant 0 : i32
    return %arg0, %c0_i32, %arg1, %arg2, %c0_i32_0 : i32, i32, i32, i32, i32
  }
}

</mosaic_0001>

<llo_original>
// kernel: tpu_custom_call.1
$region0: #{tpu_custom_call.1}
  #allocation0 [shape = 'u32[]', space=smem, size = 0x4, offset = 0x4, fixed_abs, tag = 'smem constant byte address 0x4 - core index']
  #allocation1 [shape = 'u32[144,128]{1,0:T(1,128)}', space=vmem, size = 0x12000, scoped, tag = 'internal scratch']
  %s0 = inlined_call_operand.hbm [shape: f32[2,4,8,32], index: 0, kind: input, shape index: {}]
  %s1 = inlined_call_operand.hbm [shape: f32[32,32], index: 1, kind: input, shape index: {}]
  %s2 = inlined_call_operand.hbm [shape: f32[2,4,4,8,8], index: 2, kind: output, shape index: {}]
  %s3 = sld [smem:[#allocation0]]
  $region49: #{tpu_custom_call.1} parent=0
    _
  %s5 = ssub.s32 1, %s3
  %s6 = scalar_select 0, %s5, %s3
  $region1: #{tpu_custom_call.1} parent=0
    #allocation2 [shape = 'u8[32768]{0}', space=vmem, size = 0x8000, scoped, tag = 'input window, operand 0']
    #allocation3 [shape = 's32[2]{0}', space=sflag, size = 0x8, scoped, tag = 'scoped memory for tpu_custom_call.1']
    #allocation4 [shape = 's32[2]{0}', space=sflag, size = 0x8, scoped, tag = 'scoped memory for tpu_custom_call.1']
    #allocation5 [shape = 'u8[16384]{0}', space=vmem, size = 0x4000, scoped, tag = 'input window, operand 1, single buffered']
    #allocation6 [shape = 's32[1]{0}', space=sflag, size = 0x4, scoped, tag = 'scoped memory for tpu_custom_call.1']
    #allocation7 [shape = 'u8[131072]{0}', space=vmem, size = 0x20000, scoped, tag = 'output window, operand 0']
    %7 = vsyncpa [#allocation3], 0
    %s8 = scalar_lea.sflag [#allocation3], 1
    %9 = vsyncpa %s8, 0
    %10 = vsyncpa [#allocation6], 0
    %11 = vsyncpa [#allocation4], 0
    %s12 = scalar_lea.sflag [#allocation4], 1
    %13 = vsyncpa %s12, 0
    loop: start=0, step=1, limit=4
    $region2: #{tpu_custom_call.1} parent=1 // loop_pre_header
      _
    $region3: #{tpu_custom_call.1} parent=1 // loop_header
      %s15 = sphi 0, %s19
      %p16 = scmp.ge.s32.totalorder %s15, 4
      %s22 = sphi 0, %s41
      %s23 = sphi 0, %s37
      %s24 = sphi 0, %s33
      %s25 = sphi 0, %s22
      %s26 = sphi 0, %s23
      %s27 = sphi 0, %s24
      %s28 = sphi 0, %s25
      %s29 = sphi 0, %s26
      %s30 = sphi 0, %s27
      %s48 = sphi 0, %s50
      %s51 = sphi 0, %s48
      %s52 = sphi 0, %s51
      %s68 = sphi 0, %s52
      %s72 = sphi 0, %s72
      %s74 = sphi 0, %s72
      %s75 = sphi 0, %s74
      %s89 = sphi 0, %s75
      %s99 = sphi 0, %s101
      %s102 = sphi 0, %s99
      %s103 = sphi 0, %s102
      %s119 = sphi 0, %s103
    $region4: #{tpu_custom_call.1} parent=1 // loop_header_branch
      %18 = sbr.rel (%p16) target = $region8
    $region5: #{tpu_custom_call.1} parent=1 // loop_body
      %s20 = ssub.s32 %s15, 1
      %s21 = ssub.s32 %s15, 2
      %s31 = sadd.s32 1, %s24
      %p32 = scmp.ge.s32.totalorder %s31, 1
      %s33 = scalar_select %p32, 0, %s31
      %s34 = sadd.s32 1, %s23
      %s35 = scalar_select %p32, %s34, %s23
      %p36 = scmp.ge.s32.totalorder %s35, 1
      %s37 = scalar_select %p36, 0, %s35
      %s38 = sadd.s32 1, %s22
      %s39 = scalar_select %p36, %s38, %s22
      %p40 = scmp.ge.s32.totalorder %s39, 2
      %s41 = scalar_select %p40, 0, %s39
      %s42 = ssub.s32 %s22, %s41
      %s43 = ssub.s32 %s23, %s37
      %s44 = sor.u32 %s42, %s43
      %s45 = ssub.s32 %s24, %s33
      %s46 = sor.u32 %s44, %s45
      %p47 = scmp.eq.s32.totalorder %s46, 0
      %s49 = sadd.s32 %s48, 1
      %s50 = scalar_select %p47, %s48, %s49
      %p53 = pneg %p47
      %p54 = scmp.eq.s32.totalorder %s15, 1
      %p55 = por %p53, %p54
      %p56 = scmp.ne.s32.totalorder %s48, %s51
      %p57 = scmp.eq.s32.totalorder %s15, 0
      %p58 = por %p56, %p57
      %p59 = scmp.ne.s32.totalorder %s48, %s51
      %p60 = scmp.eq.s32.totalorder %s20, 1
      %p61 = por %p59, %p60
      %p62 = scmp.ne.s32.totalorder %s51, %s52
      %p63 = scmp.eq.s32.totalorder %s20, 0
      %p64 = por %p62, %p63
      %p65 = scmp.ne.s32.totalorder %s51, %s52
      %p66 = scmp.eq.s32.totalorder %s21, 1
      %p67 = por %p65, %p66
      %p69 = scmp.ne.s32.totalorder %s52, %s68
      %p70 = scmp.eq.s32.totalorder %s21, 0
      %p71 = por %p69, %p70
      %s73 = sadd.s32 %s72, 1
      %p76 = scmp.eq.s32.totalorder %s15, 1
      %p77 = scmp.ne.s32.totalorder %s72, %s74
      %p78 = scmp.eq.s32.totalorder %s15, 0
      %p79 = por %p77, %p78
      %p80 = scmp.ne.s32.totalorder %s72, %s74
      %p81 = scmp.eq.s32.totalorder %s20, 1
      %p82 = por %p80, %p81
      %p83 = scmp.ne.s32.totalorder %s74, %s75
      %p84 = scmp.eq.s32.totalorder %s20, 0
      %p85 = por %p83, %p84
      %p86 = scmp.ne.s32.totalorder %s74, %s75
      %p87 = scmp.eq.s32.totalorder %s21, 1
      %p88 = por %p86, %p87
      %p90 = scmp.ne.s32.totalorder %s75, %s89
      %p91 = scmp.eq.s32.totalorder %s21, 0
      %p92 = por %p90, %p91
      %s93 = ssub.s32 %s22, %s41
      %s94 = ssub.s32 %s23, %s37
      %s95 = sor.u32 %s93, %s94
      %s96 = ssub.s32 %s24, %s33
      %s97 = sor.u32 %s95, %s96
      %p98 = scmp.eq.s32.totalorder %s97, 0
      %s100 = sadd.s32 %s99, 1
      %s101 = scalar_select %p98, %s99, %s100
      %p104 = pneg %p98
      %p105 = scmp.eq.s32.totalorder %s15, 1
      %p106 = por %p104, %p105
      %p107 = scmp.ne.s32.totalorder %s99, %s102
      %p108 = scmp.eq.s32.totalorder %s15, 0
      %p109 = por %p107, %p108
      %p110 = scmp.ne.s32.totalorder %s99, %s102
      %p111 = scmp.eq.s32.totalorder %s20, 1
      %p112 = por %p110, %p111
      %p113 = scmp.ne.s32.totalorder %s102, %s103
      %p114 = scmp.eq.s32.totalorder %s20, 0
      %p115 = por %p113, %p114
      %p116 = scmp.ne.s32.totalorder %s102, %s103
      %p117 = scmp.eq.s32.totalorder %s21, 1
      %p118 = por %p116, %p117
      %p120 = scmp.ne.s32.totalorder %s103, %s119
      %p121 = scmp.eq.s32.totalorder %s21, 0
      %p122 = por %p120, %p121
      %p123 = scmp.le.s32.totalorder 1, %s15
      %p124 = scmp.lt.s32.totalorder %s15, 3
      %p125 = pnand %p123, %p124
      %p126 = pneg %p125
      // Predicated region
      $region9: #{tpu_custom_call.1} parent=5 // pred_check
        _
      $region10: #{tpu_custom_call.1} parent=5 // pred_check_branch
        %128 = sbr.rel (%p125) target = $region12
      $region11: #{tpu_custom_call.1} parent=5 // pred_region
        %s129 = ssub.s32 %s15, 1
        // Predicated region
        $region13: #{tpu_custom_call.1} parent=11 // pred_check
          %p130 = pneg %p85
        $region14: #{tpu_custom_call.1} parent=11 // pred_check_branch
          %132 = sbr.rel (%p130) target = $region16
        $region15: #{tpu_custom_call.1} parent=11 // pred_region
          %s134 = ssub.s32 512, 512
          %135 = vsyncadd [#allocation6], %s134
          %s136 = sshll.u32 [#allocation5], 4
          %s137 = int_to_ptr.vmem [resolvable:$true] %s136
          %142 = dma.hbm_to_vmem [thread:$0]  %s1, 512, %s137, [#allocation6], 128, 128, 8
        $region16: #{tpu_custom_call.1} parent=11 // pred_fallthru
          _
      $region12: #{tpu_custom_call.1} parent=5 // pred_fallthru
        _
      %p143 = scmp.lt.s32.totalorder %s15, 2
      // Predicated region
      $region17: #{tpu_custom_call.1} parent=5 // pred_check
        %p144 = pneg %p143
      $region18: #{tpu_custom_call.1} parent=5 // pred_check_branch
        %146 = sbr.rel (%p144) target = $region20
      $region19: #{tpu_custom_call.1} parent=5 // pred_region
        // Predicated region
        $region21: #{tpu_custom_call.1} parent=19 // pred_check
          %p147 = pneg %p58
        $region22: #{tpu_custom_call.1} parent=19 // pred_check_branch
          %149 = sbr.rel (%p147) target = $region24
        $region23: #{tpu_custom_call.1} parent=19 // pred_region
          %s150 = sand.u32 %s48, 1
          %s151 = scalar_lea.sflag [#allocation3], %s150
          %s152 = sand.u32 %s48, 1
          %s153 = smul.addr %s152, 32
          %s154 = scalar_lea.vmem [#allocation2], %s153
          %s155 = smul.u32 4, %s23
          %s157 = ssub.s32 512, 512
          %158 = vsyncadd %s151, %s157
          %s159 = sadd.s32 %s24, %s155
          %s160 = smul.addr %s22, 4
          %s161 = sadd.s32 %s159, %s160
          %s162 = smul.addr %s161, 128
          %s163 = scalar_lea.hbm %s0, %s162
          %s164 = sshll.u32 %s154, 4
          %s165 = int_to_ptr.vmem [resolvable:$true] %s164
          %170 = dma.hbm_to_vmem [thread:$0]  %s163, 512, %s165, %s151, 128, 128, 8
        $region24: #{tpu_custom_call.1} parent=19 // pred_fallthru
          _
      $region20: #{tpu_custom_call.1} parent=5 // pred_fallthru
        _
      %p171 = scmp.le.s32.totalorder 1, %s15
      %p172 = scmp.lt.s32.totalorder %s15, 3
      %p173 = pnand %p171, %p172
      %p174 = pneg %p173
      // Predicated region
      $region25: #{tpu_custom_call.1} parent=5 // pred_check
        _
      $region26: #{tpu_custom_call.1} parent=5 // pred_check_branch
        %176 = sbr.rel (%p173) target = $region28
      $region27: #{tpu_custom_call.1} parent=5 // pred_region
        %s177 = ssub.s32 %s15, 1
        %s178 = sand.u32 %s51, 1
        %s179 = scalar_lea.sflag [#allocation3], %s178
        %s180 = sand.u32 %s51, 1
        %s181 = smul.addr %s180, 32
        %s182 = scalar_lea.vmem [#allocation2], %s181
        // Predicated region
        $region29: #{tpu_custom_call.1} parent=27 // pred_check
          %p183 = pneg %p64
        $region30: #{tpu_custom_call.1} parent=27 // pred_check_branch
          %185 = sbr.rel (%p183) target = $region32
        $region31: #{tpu_custom_call.1} parent=27 // pred_region
          %186 = dma.done %s179, 512
        $region32: #{tpu_custom_call.1} parent=27 // pred_fallthru
          _
        // Predicated region
        $region33: #{tpu_custom_call.1} parent=27 // pred_check
          %p187 = pneg %p85
        $region34: #{tpu_custom_call.1} parent=27 // pred_check_branch
          %189 = sbr.rel (%p187) target = $region36
        $region35: #{tpu_custom_call.1} parent=27 // pred_region
          %190 = dma.done [#allocation6], 512
        $region36: #{tpu_custom_call.1} parent=27 // pred_fallthru
          _
        %s191 = sand.u32 %s51, 1
        %s192 = scalar_lea.sflag [#allocation3], %s191
        %s193 = sand.u32 %s51, 1
        %s194 = smul.addr %s193, 32
        %s195 = scalar_lea.vmem [#allocation2], %s194
        %p196 = pneg %p64
        %p197 = pneg %p61
        %p198 = pneg %p85
        %p199 = pneg %p82
        %p200 = pneg %p115
        %p201 = pneg %p112
        %s202 = sand.u32 %s102, 1
        %s203 = scalar_lea.sflag [#allocation4], %s202
        %s204 = sand.u32 %s102, 1
        %s205 = smul.addr %s204, 128
        %s206 = scalar_lea.vmem [#allocation7], %s205
        %s207 = smul.u32 4, %s26
        %s208 = smul.u32 4, %s26
        %v209 = vld [vmem:[%s182] sm:$0xff]
        %v210 = vld [vmem:[%s182 + $0x8] sm:$0xff]
        %v211 = vld [vmem:[%s182 + $0x10] sm:$0xff]
        %v212 = vld [vmem:[%s182 + $0x18] sm:$0xff]
        %v213 = vld [vmem:[#allocation5] sm:$0xff]
        %v214 = vld [vmem:[#allocation5 + $0x8] sm:$0xff]
        %v215 = vld [vmem:[#allocation5 + $0x10] sm:$0xff]
        %v216 = vld [vmem:[#allocation5 + $0x18] sm:$0xff]
        %vm217 = vcmask 261120
        %v219 = vsel %vm217, %v209, 0
        %v222 = vsel %vm217, %v210, 0
        %v225 = vsel %vm217, %v211, 0
        %v228 = vsel %vm217, %v212, 0
        %230 = vmatprep.subr.mxu0 0.0
        %231 = vmatpush1.msra.mxu0 %v213
        %232 = vmatprep.subr.mxu0 0.0
        %233 = vmatpush1.msra.mxu0 %v214
        %234 = vmatprep.subr.mxu0 0.0
        %235 = vmatpush1.msra.mxu0 %v215
        %236 = vmatprep.subr.mxu0 0.0
        %237 = vmatpush1.msra.mxu0 %v216
        %238 = vmatprep.subr.mxu0 0.0
        %239 = vmatpush1.msra.mxu0 0.0
        %240 = vmatprep.subr.mxu0 0.0
        %241 = vmatpush1.msra.mxu0 0.0
        %242 = vmatprep.subr.mxu0 0.0
        %243 = vmatpush1.msra.mxu0 0.0
        %244 = vmatprep.subr.mxu0 0.0
        %245 = vmatpush1.msra.mxu0 0.0
        %246 = vmatprep.subr.mxu0 0.0
        %247 = vmatpush1.msra.mxu0 0.0
        %248 = vmatprep.subr.mxu0 0.0
        %249 = vmatpush1.msra.mxu0 0.0
        %250 = vmatprep.subr.mxu0 0.0
        %251 = vmatpush1.msra.mxu0 0.0
        %252 = vmatprep.subr.mxu0 0.0
        %253 = vmatpush1.msra.mxu0 0.0
        %254 = vmatprep.subr.mxu0 0.0
        %255 = vmatpush1.msra.mxu0 0.0
        %256 = vmatprep.subr.mxu0 0.0
        %257 = vmatpush1.msra.mxu0 0.0
        %258 = vmatprep.subr.mxu0 0.0
        %259 = vmatpush1.msra.mxu0 0.0
        %260 = vmatprep.subr.mxu0 0.0
        %261 = vmatpush1.msra.mxu0 0.0
        %262 = vmatprep.subr.mxu0 0.0
        %263 = vmatpush1.msra.mxu0 0.0
        %264 = vmatprep.subr.mxu0 0.0
        %265 = vmatpush1.msra.mxu0 0.0
        %266 = vmatprep.subr.mxu0 0.0
        %267 = vmatpush1.msra.mxu0 0.0
        %268 = vmatprep.subr.mxu0 0.0
        %269 = vmatpush1.msra.mxu0 0.0
        %270 = vmatprep.subr.mxu0 0.0
        %271 = vmatpush1.msra.mxu0 0.0
        %272 = vmatprep.subr.mxu0 0.0
        %273 = vmatpush1.msra.mxu0 0.0
        %274 = vmatprep.subr.mxu0 0.0
        %275 = vmatpush1.msra.mxu0 0.0
        %276 = vmatprep.subr.mxu0 0.0
        %277 = vmatpush1.msra.mxu0 0.0
        %278 = vmatprep.subr.mxu0 0.0
        %279 = vmatpush1.msra.mxu0 0.0
        %280 = vmatprep.subr.mxu0 0.0
        %281 = vmatpush1.msra.mxu0 0.0
        %282 = vmatprep.subr.mxu0 0.0
        %283 = vmatpush1.msra.mxu0 0.0
        %284 = vmatprep.subr.mxu0 0.0
        %285 = vmatpush1.msra.mxu0 0.0
        %286 = vmatprep.subr.mxu0 0.0
        %287 = vmatpush1.msra.mxu0 0.0
        %288 = vmatprep.subr.mxu0 0.0
        %289 = vmatpush1.msra.mxu0 0.0
        %290 = vmatprep.subr.mxu0 0.0
        %291 = vmatpush1.msra.mxu0 0.0
        %292 = vmatprep.subr.mxu0 0.0
        %293 = vmatpush1.msra.mxu0 0.0
        %294 = vmatprep.mubr.f32.mxu0 0.0
        %295 = vmatmul.mubr.f32.gmra.mrb[0].mxu0 %v219
        %v296 = vpop.f32.mrb[0].mxu0
        %v297 = vadd.f32 0.0, %v296
        %v298 = vpop.f32.mrb[0].mxu0
        %299 = vmatprep.mubr.f32.mxu0 0.0
        %300 = vmatmul.mubr.f32.gmra.mrb[0].mxu0 %v222
        %v301 = vpop.f32.mrb[0].mxu0
        %v302 = vadd.f32 0.0, %v301
        %v303 = vpop.f32.mrb[0].mxu0
        %304 = vmatprep.mubr.f32.mxu0 0.0
        %305 = vmatmul.mubr.f32.gmra.mrb[0].mxu0 %v225
        %v306 = vpop.f32.mrb[0].mxu0
        %v307 = vadd.f32 0.0, %v306
        %v308 = vpop.f32.mrb[0].mxu0
        %309 = vmatprep.mubr.f32.mxu0 0.0
        %310 = vmatmul.mubr.f32.gmra.mrb[0].mxu0 %v228
        %v311 = vpop.f32.mrb[0].mxu0
        %v312 = vadd.f32 0.0, %v311
        %v313 = vpop.f32.mrb[0].mxu0
        %314 = vdwg.mxu0
        %vm315 = vcmask 64512
        %316 = vst.msk [vmem:[%s206] sm:$0xff] %vm315, %v297
        %317 = vst.msk [vmem:[%s206 + $0x8] sm:$0xff] %vm315, %v302
        %318 = vst.msk [vmem:[%s206 + $0x10] sm:$0xff] %vm315, %v307
        %319 = vst.msk [vmem:[%s206 + $0x18] sm:$0xff] %vm315, %v312
        %324 = vrot.lane.b32.xlu0 %v297, 120
        %v325 = vpop.permute.xlu0 %324
        %326 = vrot.lane.b32.xlu0 %v302, 120
        %v327 = vpop.permute.xlu0 %326
        %328 = vrot.lane.b32.xlu0 %v307, 120
        %v329 = vpop.permute.xlu0 %328
        %330 = vrot.lane.b32.xlu0 %v312, 120
        %v331 = vpop.permute.xlu0 %330
        %s336 = scalar_lea.vmem %s206, 32 [#allocation7]
        %337 = vst.msk [vmem:[%s336] sm:$0xff] %vm315, %v325
        %338 = vst.msk [vmem:[%s336 + $0x8] sm:$0xff] %vm315, %v327
        %339 = vst.msk [vmem:[%s336 + $0x10] sm:$0xff] %vm315, %v329
        %340 = vst.msk [vmem:[%s336 + $0x18] sm:$0xff] %vm315, %v331
        %341 = vrot.lane.b32.xlu0 %v297, 112
        %v342 = vpop.permute.xlu0 %341
        %343 = vrot.lane.b32.xlu0 %v302, 112
        %v344 = vpop.permute.xlu0 %343
        %345 = vrot.lane.b32.xlu0 %v307, 112
        %v346 = vpop.permute.xlu0 %345
        %347 = vrot.lane.b32.xlu0 %v312, 112
        %v348 = vpop.permute.xlu0 %347
        %s353 = scalar_lea.vmem %s206, 64 [#allocation7]
        %354 = vst.msk [vmem:[%s353] sm:$0xff] %vm315, %v342
        %355 = vst.msk [vmem:[%s353 + $0x8] sm:$0xff] %vm315, %v344
        %356 = vst.msk [vmem:[%s353 + $0x10] sm:$0xff] %vm315, %v346
        %357 = vst.msk [vmem:[%s353 + $0x18] sm:$0xff] %vm315, %v348
        %358 = vrot.lane.b32.xlu0 %v297, 104
        %v359 = vpop.permute.xlu0 %358
        %360 = vrot.lane.b32.xlu0 %v302, 104
        %v361 = vpop.permute.xlu0 %360
        %362 = vrot.lane.b32.xlu0 %v307, 104
        %v363 = vpop.permute.xlu0 %362
        %364 = vrot.lane.b32.xlu0 %v312, 104
        %v365 = vpop.permute.xlu0 %364
        %s370 = scalar_lea.vmem %s206, 96 [#allocation7]
        %371 = vst.msk [vmem:[%s370] sm:$0xff] %vm315, %v359
        %372 = vst.msk [vmem:[%s370 + $0x8] sm:$0xff] %vm315, %v361
        %373 = vst.msk [vmem:[%s370 + $0x10] sm:$0xff] %vm315, %v363
        %374 = vst.msk [vmem:[%s370 + $0x18] sm:$0xff] %vm315, %v365
        %s375 = sand.u32 %s102, 1
        %s376 = scalar_lea.sflag [#allocation4], %s375
        %s377 = sand.u32 %s102, 1
        %s378 = smul.addr %s377, 128
        %s379 = scalar_lea.vmem [#allocation7], %s378
        // Predicated region
        $region37: #{tpu_custom_call.1} parent=27 // pred_check
          %p380 = pneg %p112
        $region38: #{tpu_custom_call.1} parent=27 // pred_check_branch
          %382 = sbr.rel (%p380) target = $region40
        $region39: #{tpu_custom_call.1} parent=27 // pred_region
          %s383 = smul.u32 4, %s26
          %s385 = ssub.s32 2048, 2048
          %386 = vsyncadd %s376, %s385
          %s387 = sadd.s32 %s27, %s383
          %s388 = smul.addr %s25, 16
          %s389 = sadd.s32 %s387, %s388
          %s390 = smul.addr %s389, 128
          %s391 = scalar_lea.hbm %s2, %s390
          %s392 = sshll.u32 %s379, 4
          %s393 = int_to_ptr.vmem [resolvable:$true] %s392
          %398 = dma.vmem_to_hbm [thread:$0]  %s393, 2048, %s391, %s376, 128, 128, 8
        $region40: #{tpu_custom_call.1} parent=27 // pred_fallthru
          _
      $region28: #{tpu_custom_call.1} parent=5 // pred_fallthru
        _
      %p399 = scmp.le.s32.totalorder 2, %s15
      // Predicated region
      $region41: #{tpu_custom_call.1} parent=5 // pred_check
        %p400 = pneg %p399
      $region42: #{tpu_custom_call.1} parent=5 // pred_check_branch
        %402 = sbr.rel (%p400) target = $region44
      $region43: #{tpu_custom_call.1} parent=5 // pred_region
        %s403 = ssub.s32 %s15, 2
        // Predicated region
        $region45: #{tpu_custom_call.1} parent=43 // pred_check
          %p404 = pneg %p118
        $region46: #{tpu_custom_call.1} parent=43 // pred_check_branch
          %406 = sbr.rel (%p404) target = $region48
        $region47: #{tpu_custom_call.1} parent=43 // pred_region
          %s407 = sand.u32 %s103, 1
          %s408 = scalar_lea.sflag [#allocation4], %s407
          %s409 = sand.u32 %s103, 1
          %s410 = smul.addr %s409, 128
          %s411 = scalar_lea.vmem [#allocation7], %s410
          %412 = dma.done %s408, 2048
        $region48: #{tpu_custom_call.1} parent=43 // pred_fallthru
          _
      $region44: #{tpu_custom_call.1} parent=5 // pred_fallthru
        _
    $region6: #{tpu_custom_call.1} parent=1 // loop_footer
      %s19 = sadd.s32 1, %s15
    $region7: #{tpu_custom_call.1} parent=1 // loop_footer_branch
      %14 = sbr.rel target = $region3
    $region8: #{tpu_custom_call.1} parent=1 // loop_exit
      _
    %413 = vsyncpa [#allocation3], 1
    %s414 = scalar_lea.sflag [#allocation3], 1
    %415 = vsyncpa %s414, 1
    %416 = vsyncpa [#allocation6], 1
    %417 = vsyncpa [#allocation4], 1
    %s418 = scalar_lea.sflag [#allocation4], 1
    %419 = vsyncpa %s418, 1

</llo_original>
